<compile_context>
chip_gen: v7x
topology: tpu7x:2x2x1
jax: 0.10.0
libtpu: 0.0.40
codegen_flags: <defaults>
</compile_context>

<pallas_src>
import functools

import jax
import jax.numpy as jnp
from jax.experimental import pallas as pl
from jax.experimental.pallas import tpu as pltpu


def _mlp_kernel(x_ref, w1_ref, b1_ref, w2_ref, b2_ref, out_ref):
    """Fused  ReLU(x @ W1 + b1) @ W2 + b2  on one batch tile."""
    x = x_ref[...]                       # (tile_b, state_dim)
    w1 = w1_ref[...]                     # (state_dim, depth)   VMEM-resident
    b1 = b1_ref[...]                     # (1, depth)
    w2 = w2_ref[...]                     # (depth, action_n)
    b2 = b2_ref[...]                     # (1, action_n)

    h = jnp.dot(x, w1, preferred_element_type=jnp.float32) + b1
    h = jnp.maximum(h, 0.0)              # ReLU
    out = jnp.dot(h, w2, preferred_element_type=jnp.float32) + b2
    out_ref[...] = out.astype(out_ref.dtype)


@functools.partial(jax.jit, static_argnames=("block_b",))
def deep_cross_entropy_forward(x, w1, b1, w2, b2, *, block_b=256):
    """Pallas wrapper: logits = ReLU(x @ W1 + b1) @ W2 + b2.

    Batch-tiled over a 1-D grid; weights/biases stay resident in VMEM across
    the whole sweep.  Handles any batch size via padding.
    """
    batch, state_dim = x.shape
    depth = w1.shape[1]
    action_n = w2.shape[1]

    # Batch tile: at most block_b rows, rounded up to a multiple of 8 sublanes.
    tile_b = min(block_b, batch)
    tile_b = ((tile_b + 7) // 8) * 8
    padded = ((batch + tile_b - 1) // tile_b) * tile_b
    if padded != batch:
        x = jnp.pad(x, ((0, padded - batch), (0, 0)))
    grid_b = padded // tile_b

    # Biases as (1, N) rows so they broadcast over the batch (sublane) axis.
    b1_2d = b1.reshape(1, depth)
    b2_2d = b2.reshape(1, action_n)

    out = pl.pallas_call(
        _mlp_kernel,
        out_shape=jax.ShapeDtypeStruct((padded, action_n), x.dtype),
        grid_spec=pl.GridSpec(
            grid=(grid_b,),
            in_specs=[
                pl.BlockSpec((tile_b, state_dim), lambda i: (i, 0)),   # x: streamed per tile
                pl.BlockSpec((state_dim, depth), lambda i: (0, 0)),    # W1: resident
                pl.BlockSpec((1, depth), lambda i: (0, 0)),            # b1: resident
                pl.BlockSpec((depth, action_n), lambda i: (0, 0)),     # W2: resident
                pl.BlockSpec((1, action_n), lambda i: (0, 0)),         # b2: resident
            ],
            out_specs=pl.BlockSpec((tile_b, action_n), lambda i: (i, 0)),
        ),
        compiler_params=pltpu.CompilerParams(
            # Batch tiles are independent -> shard across TCs on v7x megacore.
            dimension_semantics=("parallel",),
        ),
    )(x, w1, b1_2d, w2, b2_2d)

    if padded != batch:
        out = out[:batch]
    return out


def _torch_linear_init(key, fan_in, fan_out, dtype=jnp.float32):
    """Deterministic init matching nn.Linear's U(-1/sqrt(fan_in), 1/sqrt(fan_in))."""
    kw, kb = jax.random.split(key)
    bound = 1.0 / jnp.sqrt(jnp.asarray(fan_in, dtype))
    # Stored as (in_features, out_features) so forward is x @ W (== PyTorch x @ W^T).
    w = jax.random.uniform(kw, (fan_in, fan_out), dtype, minval=-bound, maxval=bound)
    b = jax.random.uniform(kb, (fan_out,), dtype, minval=-bound, maxval=bound)
    return w, b


def reference_forward(x, w1, b1, w2, b2):
    """Pure-JAX reference for correctness checking."""
    h = jnp.maximum(x @ w1 + b1, 0.0)
    return h @ w2 + b2


if __name__ == "__main__":
    # CartPole-like env: Box obs of dim 4, Discrete(2) actions, depth=64.
    # Batch = one full CE-population evaluation worth of states so the batch
    # grid (4 tiles of 256 rows) is actually exercised.
    batch = 1024
    state_dim = 4
    depth = 64
    action_n = 2

    key = jax.random.PRNGKey(0)
    k_x, k_l1, k_l2 = jax.random.split(key, 3)

    x = jax.random.normal(k_x, (batch, state_dim), jnp.float32)
    w1, b1 = _torch_linear_init(k_l1, state_dim, depth)
    w2, b2 = _torch_linear_init(k_l2, depth, action_n)

    logits = deep_cross_entropy_forward(x, w1, b1, w2, b2)
    jax.block_until_ready(logits)

    ref = reference_forward(x, w1, b1, w2, b2)
    assert logits.shape == (batch, action_n)
    assert jnp.allclose(logits, ref, atol=1e-5, rtol=1e-5), "mismatch vs reference"

    print("KERNEL_OK")
</pallas_src>

<mosaic_0001>
module attributes {stable_mosaic.version = 11 : i64} {
  func.func @_mlp_kernel(%arg0: i32, %arg1: memref<256x4xf32, #tpu.memory_space<vmem>>, %arg2: memref<4x64xf32, #tpu.memory_space<vmem>>, %arg3: memref<1x64xf32, #tpu.memory_space<vmem>>, %arg4: memref<64x2xf32, #tpu.memory_space<vmem>>, %arg5: memref<1x2xf32, #tpu.memory_space<vmem>>, %arg6: memref<256x2xf32, #tpu.memory_space<vmem>>) attributes {dimension_semantics = [#tpu.dimension_semantics<parallel>], iteration_bounds = array<i64: 4>, scalar_prefetch = 0 : i64, scratch_operands = 0 : i64, tpu.core_type = #tpu.core_type<tc>, window_params = [{transform_indices = @transform_0, window_bounds = array<i64: 256, 4>}, {pipeline_mode = #tpu.pipeline_mode<synchronous>, transform_indices = @transform_1, window_bounds = array<i64: 4, 64>}, {pipeline_mode = #tpu.pipeline_mode<synchronous>, transform_indices = @transform_2, window_bounds = array<i64: 1, 64>}, {pipeline_mode = #tpu.pipeline_mode<synchronous>, transform_indices = @transform_3, window_bounds = array<i64: 64, 2>}, {pipeline_mode = #tpu.pipeline_mode<synchronous>, transform_indices = @transform_4, window_bounds = array<i64: 1, 2>}, {transform_indices = @transform_5, window_bounds = array<i64: 256, 2>}]} {
    %c0 = arith.constant 0 : index
    %c0_0 = arith.constant 0 : index
    %0 = vector.load %arg1[%c0, %c0_0] : memref<256x4xf32, #tpu.memory_space<vmem>>, vector<256x4xf32>
    %c0_1 = arith.constant 0 : index
    %c0_2 = arith.constant 0 : index
    %1 = vector.load %arg2[%c0_1, %c0_2] : memref<4x64xf32, #tpu.memory_space<vmem>>, vector<4x64xf32>
    %c0_3 = arith.constant 0 : index
    %c0_4 = arith.constant 0 : index
    %2 = vector.load %arg3[%c0_3, %c0_4] : memref<1x64xf32, #tpu.memory_space<vmem>>, vector<1x64xf32>
    %c0_5 = arith.constant 0 : index
    %c0_6 = arith.constant 0 : index
    %3 = vector.load %arg4[%c0_5, %c0_6] : memref<64x2xf32, #tpu.memory_space<vmem>>, vector<64x2xf32>
    %c0_7 = arith.constant 0 : index
    %c0_8 = arith.constant 0 : index
    %4 = vector.load %arg5[%c0_7, %c0_8] : memref<1x2xf32, #tpu.memory_space<vmem>>, vector<1x2xf32>
    %cst = arith.constant dense<0.000000e+00> : vector<256x64xf32>
    %5 = tpu.matmul %0, %1, %cst {dimension_numbers = #tpu.dot_dimension_numbers<[1], [0], [0], [1], [0, 0, 1, 1], [], []>} : vector<256x4xf32>, vector<4x64xf32>, vector<256x64xf32> -> vector<256x64xf32>
    %6 = vector.broadcast %2 : vector<1x64xf32> to vector<256x64xf32>
    %7 = arith.addf %5, %6 : vector<256x64xf32>
    %cst_9 = arith.constant 0.000000e+00 : f32
    %8 = vector.broadcast %cst_9 : f32 to vector<256x64xf32>
    %9 = arith.maximumf %7, %8 : vector<256x64xf32>
    %cst_10 = arith.constant dense<0.000000e+00> : vector<256x2xf32>
    %10 = tpu.matmul %9, %3, %cst_10 {dimension_numbers = #tpu.dot_dimension_numbers<[1], [0], [0], [1], [0, 0, 1, 1], [], []>} : vector<256x64xf32>, vector<64x2xf32>, vector<256x2xf32> -> vector<256x2xf32>
    %11 = vector.broadcast %4 : vector<1x2xf32> to vector<256x2xf32>
    %12 = arith.addf %10, %11 : vector<256x2xf32>
    %c0_11 = arith.constant 0 : index
    %c0_12 = arith.constant 0 : index
    %13 = vector.load %arg6[%c0_11, %c0_12] : memref<256x2xf32, #tpu.memory_space<vmem>>, vector<256x2xf32>
    tpu.vector_store %arg6[%c0_11, %c0_12], %12 {strides = array<i32>} : memref<256x2xf32, #tpu.memory_space<vmem>>, vector<256x2xf32>,
    return
  }
  func.func @transform_0(%arg0: i32) -> (i32, i32) {
    %c0_i32 = arith.constant 0 : i32
    %c0_i32_0 = arith.constant 0 : i32
    return %arg0, %c0_i32 : i32, i32
  }
  func.func @transform_1(%arg0: i32) -> (i32, i32) {
    %c0_i32 = arith.constant 0 : i32
    %c0_i32_0 = arith.constant 0 : i32
    %c0_i32_1 = arith.constant 0 : i32
    return %c0_i32, %c0_i32_0 : i32, i32
  }
  func.func @transform_2(%arg0: i32) -> (i32, i32) {
    %c0_i32 = arith.constant 0 : i32
    %c0_i32_0 = arith.constant 0 : i32
    %c0_i32_1 = arith.constant 0 : i32
    return %c0_i32, %c0_i32_0 : i32, i32
  }
  func.func @transform_3(%arg0: i32) -> (i32, i32) {
    %c0_i32 = arith.constant 0 : i32
    %c0_i32_0 = arith.constant 0 : i32
    %c0_i32_1 = arith.constant 0 : i32
    return %c0_i32, %c0_i32_0 : i32, i32
  }
  func.func @transform_4(%arg0: i32) -> (i32, i32) {
    %c0_i32 = arith.constant 0 : i32
    %c0_i32_0 = arith.constant 0 : i32
    %c0_i32_1 = arith.constant 0 : i32
    return %c0_i32, %c0_i32_0 : i32, i32
  }
  func.func @transform_5(%arg0: i32) -> (i32, i32) {
    %c0_i32 = arith.constant 0 : i32
    %c0_i32_0 = arith.constant 0 : i32
    return %arg0, %c0_i32 : i32, i32
  }
}

</mosaic_0001>

<llo_original>
// kernel: deep_cross_entropy_forward.1
$region0: #{deep_cross_entropy_forward.1}
  #allocation0 [shape = 'u32[]', space=smem, size = 0x4, offset = 0x4, fixed_abs, tag = 'smem constant byte address 0x4 - core index']
  #allocation1 [shape = 'u32[144,128]{1,0:T(1,128)}', space=vmem, size = 0x12000, scoped, tag = 'internal scratch']
  %s0 = inlined_call_operand.vmem [shape: f32[1024,4], index: 0, kind: input, shape index: {}]
  %s1 = inlined_call_operand.vmem [shape: f32[4,64], index: 1, kind: input, shape index: {}]
  %s2 = inlined_call_operand.vmem [shape: f32[1,64], index: 2, kind: input, shape index: {}]
  %s3 = inlined_call_operand.vmem [shape: f32[64,2], index: 3, kind: input, shape index: {}]
  %s4 = inlined_call_operand.vmem [shape: f32[1,2], index: 4, kind: input, shape index: {}]
  %s5 = inlined_call_operand.vmem [shape: f32[1024,2], index: 5, kind: output, shape index: {}]
  %s6 = sld [smem:[#allocation0]]
  $region53: #{deep_cross_entropy_forward.1} parent=0
    _
  %s8 = ssub.s32 1, %s6
  %s9 = scalar_select 0, %s8, %s6
  loop: start=0, step=1, limit=6
  $region2: #{deep_cross_entropy_forward.1} parent=0 // loop_pre_header
    _
  $region3: #{deep_cross_entropy_forward.1} parent=0 // loop_header
    %s11 = sphi 0, %s15
    %p12 = scmp.ge.s32.totalorder %s11, 6
    %s21 = sphi 0, %s23
    %s24 = sphi 0, %s21
    %s25 = sphi 0, %s24
    %s41 = sphi 0, %s25
    %s45 = sphi 0, %s45
    %s47 = sphi 0, %s45
    %s48 = sphi 0, %s47
    %s62 = sphi 0, %s48
    %s66 = sphi 0, %s66
    %s68 = sphi 0, %s66
    %s69 = sphi 0, %s68
    %s83 = sphi 0, %s69
    %s87 = sphi 0, %s87
    %s89 = sphi 0, %s87
    %s90 = sphi 0, %s89
    %s104 = sphi 0, %s90
    %s108 = sphi 0, %s108
    %s110 = sphi 0, %s108
    %s111 = sphi 0, %s110
    %s125 = sphi 0, %s111
    %s131 = sphi 0, %s133
    %s134 = sphi 0, %s131
    %s135 = sphi 0, %s134
    %s151 = sphi 0, %s135
  $region4: #{deep_cross_entropy_forward.1} parent=0 // loop_header_branch
    %14 = sbr.rel (%p12) target = $region8
  $region5: #{deep_cross_entropy_forward.1} parent=0 // loop_body
    %s16 = ssub.s32 %s11, 1
    %s17 = ssub.s32 %s11, 2
    %s18 = sadd.s32 %s11, 1
    %s19 = ssub.s32 %s11, %s18
    %p20 = scmp.eq.s32.totalorder %s19, 0
    %s22 = sadd.s32 %s21, 1
    %s23 = scalar_select %p20, %s21, %s22
    %p26 = pneg %p20
    %p27 = scmp.eq.s32.totalorder %s11, 3
    %p28 = por %p26, %p27
    %p29 = scmp.ne.s32.totalorder %s21, %s24
    %p30 = scmp.eq.s32.totalorder %s11, 0
    %p31 = por %p29, %p30
    %p32 = scmp.ne.s32.totalorder %s21, %s24
    %p33 = scmp.eq.s32.totalorder %s16, 3
    %p34 = por %p32, %p33
    %p35 = scmp.ne.s32.totalorder %s24, %s25
    %p36 = scmp.eq.s32.totalorder %s16, 0
    %p37 = por %p35, %p36
    %p38 = scmp.ne.s32.totalorder %s24, %s25
    %p39 = scmp.eq.s32.totalorder %s17, 3
    %p40 = por %p38, %p39
    %p42 = scmp.ne.s32.totalorder %s25, %s41
    %p43 = scmp.eq.s32.totalorder %s17, 0
    %p44 = por %p42, %p43
    %s46 = sadd.s32 %s45, 1
    %p49 = scmp.eq.s32.totalorder %s11, 3
    %p50 = scmp.ne.s32.totalorder %s45, %s47
    %p51 = scmp.eq.s32.totalorder %s11, 0
    %p52 = por %p50, %p51
    %p53 = scmp.ne.s32.totalorder %s45, %s47
    %p54 = scmp.eq.s32.totalorder %s16, 3
    %p55 = por %p53, %p54
    %p56 = scmp.ne.s32.totalorder %s47, %s48
    %p57 = scmp.eq.s32.totalorder %s16, 0
    %p58 = por %p56, %p57
    %p59 = scmp.ne.s32.totalorder %s47, %s48
    %p60 = scmp.eq.s32.totalorder %s17, 3
    %p61 = por %p59, %p60
    %p63 = scmp.ne.s32.totalorder %s48, %s62
    %p64 = scmp.eq.s32.totalorder %s17, 0
    %p65 = por %p63, %p64
    %s67 = sadd.s32 %s66, 1
    %p70 = scmp.eq.s32.totalorder %s11, 3
    %p71 = scmp.ne.s32.totalorder %s66, %s68
    %p72 = scmp.eq.s32.totalorder %s11, 0
    %p73 = por %p71, %p72
    %p74 = scmp.ne.s32.totalorder %s66, %s68
    %p75 = scmp.eq.s32.totalorder %s16, 3
    %p76 = por %p74, %p75
    %p77 = scmp.ne.s32.totalorder %s68, %s69
    %p78 = scmp.eq.s32.totalorder %s16, 0
    %p79 = por %p77, %p78
    %p80 = scmp.ne.s32.totalorder %s68, %s69
    %p81 = scmp.eq.s32.totalorder %s17, 3
    %p82 = por %p80, %p81
    %p84 = scmp.ne.s32.totalorder %s69, %s83
    %p85 = scmp.eq.s32.totalorder %s17, 0
    %p86 = por %p84, %p85
    %s88 = sadd.s32 %s87, 1
    %p91 = scmp.eq.s32.totalorder %s11, 3
    %p92 = scmp.ne.s32.totalorder %s87, %s89
    %p93 = scmp.eq.s32.totalorder %s11, 0
    %p94 = por %p92, %p93
    %p95 = scmp.ne.s32.totalorder %s87, %s89
    %p96 = scmp.eq.s32.totalorder %s16, 3
    %p97 = por %p95, %p96
    %p98 = scmp.ne.s32.totalorder %s89, %s90
    %p99 = scmp.eq.s32.totalorder %s16, 0
    %p100 = por %p98, %p99
    %p101 = scmp.ne.s32.totalorder %s89, %s90
    %p102 = scmp.eq.s32.totalorder %s17, 3
    %p103 = por %p101, %p102
    %p105 = scmp.ne.s32.totalorder %s90, %s104
    %p106 = scmp.eq.s32.totalorder %s17, 0
    %p107 = por %p105, %p106
    %s109 = sadd.s32 %s108, 1
    %p112 = scmp.eq.s32.totalorder %s11, 3
    %p113 = scmp.ne.s32.totalorder %s108, %s110
    %p114 = scmp.eq.s32.totalorder %s11, 0
    %p115 = por %p113, %p114
    %p116 = scmp.ne.s32.totalorder %s108, %s110
    %p117 = scmp.eq.s32.totalorder %s16, 3
    %p118 = por %p116, %p117
    %p119 = scmp.ne.s32.totalorder %s110, %s111
    %p120 = scmp.eq.s32.totalorder %s16, 0
    %p121 = por %p119, %p120
    %p122 = scmp.ne.s32.totalorder %s110, %s111
    %p123 = scmp.eq.s32.totalorder %s17, 3
    %p124 = por %p122, %p123
    %p126 = scmp.ne.s32.totalorder %s111, %s125
    %p127 = scmp.eq.s32.totalorder %s17, 0
    %p128 = por %p126, %p127
    %s129 = ssub.s32 %s11, %s18
    %p130 = scmp.eq.s32.totalorder %s129, 0
    %s132 = sadd.s32 %s131, 1
    %s133 = scalar_select %p130, %s131, %s132
    %p136 = pneg %p130
    %p137 = scmp.eq.s32.totalorder %s11, 3
    %p138 = por %p136, %p137
    %p139 = scmp.ne.s32.totalorder %s131, %s134
    %p140 = scmp.eq.s32.totalorder %s11, 0
    %p141 = por %p139, %p140
    %p142 = scmp.ne.s32.totalorder %s131, %s134
    %p143 = scmp.eq.s32.totalorder %s16, 3
    %p144 = por %p142, %p143
    %p145 = scmp.ne.s32.totalorder %s134, %s135
    %p146 = scmp.eq.s32.totalorder %s16, 0
    %p147 = por %p145, %p146
    %p148 = scmp.ne.s32.totalorder %s134, %s135
    %p149 = scmp.eq.s32.totalorder %s17, 3
    %p150 = por %p148, %p149
    %p152 = scmp.ne.s32.totalorder %s135, %s151
    %p153 = scmp.eq.s32.totalorder %s17, 0
    %p154 = por %p152, %p153
    %p155 = scmp.le.s32.totalorder 1, %s11
    %p156 = scmp.lt.s32.totalorder %s11, 5
    %p157 = pnand %p155, %p156
    %p158 = pneg %p157
    // Predicated region
    $region9: #{deep_cross_entropy_forward.1} parent=5 // pred_check
      _
    $region10: #{deep_cross_entropy_forward.1} parent=5 // pred_check_branch
      %160 = sbr.rel (%p157) target = $region12
    $region11: #{deep_cross_entropy_forward.1} parent=5 // pred_region
      %s161 = ssub.s32 %s11, 1
      // Predicated region
      $region13: #{deep_cross_entropy_forward.1} parent=11 // pred_check
        %p162 = pneg %p58
      $region14: #{deep_cross_entropy_forward.1} parent=11 // pred_check_branch
        %164 = sbr.rel (%p162) target = $region16
      $region15: #{deep_cross_entropy_forward.1} parent=11 // pred_region
        _
      $region16: #{deep_cross_entropy_forward.1} parent=11 // pred_fallthru
        _
      // Predicated region
      $region17: #{deep_cross_entropy_forward.1} parent=11 // pred_check
        %p165 = pneg %p79
      $region18: #{deep_cross_entropy_forward.1} parent=11 // pred_check_branch
        %167 = sbr.rel (%p165) target = $region20
      $region19: #{deep_cross_entropy_forward.1} parent=11 // pred_region
        _
      $region20: #{deep_cross_entropy_forward.1} parent=11 // pred_fallthru
        _
      // Predicated region
      $region21: #{deep_cross_entropy_forward.1} parent=11 // pred_check
        %p168 = pneg %p100
      $region22: #{deep_cross_entropy_forward.1} parent=11 // pred_check_branch
        %170 = sbr.rel (%p168) target = $region24
      $region23: #{deep_cross_entropy_forward.1} parent=11 // pred_region
        _
      $region24: #{deep_cross_entropy_forward.1} parent=11 // pred_fallthru
        _
      // Predicated region
      $region25: #{deep_cross_entropy_forward.1} parent=11 // pred_check
        %p171 = pneg %p121
      $region26: #{deep_cross_entropy_forward.1} parent=11 // pred_check_branch
        %173 = sbr.rel (%p171) target = $region28
      $region27: #{deep_cross_entropy_forward.1} parent=11 // pred_region
        _
      $region28: #{deep_cross_entropy_forward.1} parent=11 // pred_fallthru
        _
    $region12: #{deep_cross_entropy_forward.1} parent=5 // pred_fallthru
      _
    %p174 = scmp.lt.s32.totalorder %s11, 4
    // Predicated region
    $region29: #{deep_cross_entropy_forward.1} parent=5 // pred_check
      %p175 = pneg %p174
    $region30: #{deep_cross_entropy_forward.1} parent=5 // pred_check_branch
      %177 = sbr.rel (%p175) target = $region32
    $region31: #{deep_cross_entropy_forward.1} parent=5 // pred_region
      // Predicated region
      $region33: #{deep_cross_entropy_forward.1} parent=31 // pred_check
        %p178 = pneg %p31
      $region34: #{deep_cross_entropy_forward.1} parent=31 // pred_check_branch
        %180 = sbr.rel (%p178) target = $region36
      $region35: #{deep_cross_entropy_forward.1} parent=31 // pred_region
        %s181 = smul.u32 32, %s11
        %p182 = scmp.lt.s32.totalorder %s181, 127
        %s183 = scalar_select %p182, %s181, 127
        %s184 = smul.addr %s183, 8
        %s185 = scalar_lea.vmem %s0, %s184
        %s186 = smul.u32 32, %s11
      $region36: #{deep_cross_entropy_forward.1} parent=31 // pred_fallthru
        _
    $region32: #{deep_cross_entropy_forward.1} parent=5 // pred_fallthru
      _
    %p187 = scmp.le.s32.totalorder 1, %s11
    %p188 = scmp.lt.s32.totalorder %s11, 5
    %p189 = pnand %p187, %p188
    %p190 = pneg %p189
    // Predicated region
    $region37: #{deep_cross_entropy_forward.1} parent=5 // pred_check
      _
    $region38: #{deep_cross_entropy_forward.1} parent=5 // pred_check_branch
      %192 = sbr.rel (%p189) target = $region40
    $region39: #{deep_cross_entropy_forward.1} parent=5 // pred_region
      %s193 = ssub.s32 %s11, 1
      %s194 = smul.u32 32, %s16
      %p195 = scmp.lt.s32.totalorder %s194, 127
      %s196 = scalar_select %p195, %s194, 127
      %s197 = smul.addr %s196, 8
      %s198 = scalar_lea.vmem %s0, %s197
      %p199 = pneg %p37
      %p200 = pneg %p34
      %p201 = pneg %p58
      %p202 = pneg %p55
      %p203 = pneg %p79
      %p204 = pneg %p76
      %p205 = pneg %p100
      %p206 = pneg %p97
      %p207 = pneg %p121
      %p208 = pneg %p118
      %p209 = pneg %p147
      %p210 = pneg %p144
      %s211 = smul.u32 32, %s16
      %p212 = scmp.lt.s32.totalorder %s211, 127
      %s213 = scalar_select %p212, %s211, 127
      %s214 = smul.addr %s213, 8
      %s215 = scalar_lea.vmem %s5, %s214
      %s216 = smul.u32 32, %s16
      %p217 = scmp.lt.s32.totalorder %s216, 127
      %s218 = scalar_select %p217, %s216, 127
      %s219 = smul.addr %s218, 8
      %s220 = scalar_lea.vmem %s0, %s219
      %s221 = smul.u32 32, %s16
      %s222 = smul.u32 32, %s16
      %p223 = scmp.lt.s32.totalorder %s222, 127
      %s224 = scalar_select %p223, %s222, 127
      %s225 = smul.addr %s224, 8
      %s226 = scalar_lea.vmem %s5, %s225
      %s227 = smul.u32 32, %s16
      %v228 = vld [vmem:[%s220] sm:$0xff]
      %v229 = vld [vmem:[%s220 + $0x8] sm:$0xff]
      %v230 = vld [vmem:[%s220 + $0x10] sm:$0xff]
      %v231 = vld [vmem:[%s220 + $0x18] sm:$0xff]
      %v232 = vld [vmem:[%s220 + $0x20] sm:$0xff]
      %v233 = vld [vmem:[%s220 + $0x28] sm:$0xff]
      %v234 = vld [vmem:[%s220 + $0x30] sm:$0xff]
      %v235 = vld [vmem:[%s220 + $0x38] sm:$0xff]
      %v236 = vld [vmem:[%s220 + $0x40] sm:$0xff]
      %v237 = vld [vmem:[%s220 + $0x48] sm:$0xff]
      %v238 = vld [vmem:[%s220 + $0x50] sm:$0xff]
      %v239 = vld [vmem:[%s220 + $0x58] sm:$0xff]
      %v240 = vld [vmem:[%s220 + $0x60] sm:$0xff]
      %v241 = vld [vmem:[%s220 + $0x68] sm:$0xff]
      %v242 = vld [vmem:[%s220 + $0x70] sm:$0xff]
      %v243 = vld [vmem:[%s220 + $0x78] sm:$0xff]
      %v244 = vld [vmem:[%s220 + $0x80] sm:$0xff]
      %v245 = vld [vmem:[%s220 + $0x88] sm:$0xff]
      %v246 = vld [vmem:[%s220 + $0x90] sm:$0xff]
      %v247 = vld [vmem:[%s220 + $0x98] sm:$0xff]
      %v248 = vld [vmem:[%s220 + $0xa0] sm:$0xff]
      %v249 = vld [vmem:[%s220 + $0xa8] sm:$0xff]
      %v250 = vld [vmem:[%s220 + $0xb0] sm:$0xff]
      %v251 = vld [vmem:[%s220 + $0xb8] sm:$0xff]
      %v252 = vld [vmem:[%s220 + $0xc0] sm:$0xff]
      %v253 = vld [vmem:[%s220 + $0xc8] sm:$0xff]
      %v254 = vld [vmem:[%s220 + $0xd0] sm:$0xff]
      %v255 = vld [vmem:[%s220 + $0xd8] sm:$0xff]
      %v256 = vld [vmem:[%s220 + $0xe0] sm:$0xff]
      %v257 = vld [vmem:[%s220 + $0xe8] sm:$0xff]
      %v258 = vld [vmem:[%s220 + $0xf0] sm:$0xff]
      %v259 = vld [vmem:[%s220 + $0xf8] sm:$0xff]
      %v260 = vld [vmem:[%s1] sm:$0xf]
      %v261 = vld [vmem:[%s2] sm:$0x1]
      %v262 = vld [vmem:[%s3] sm:$0xff]
      %v263 = vld [vmem:[%s3 + $0x8] sm:$0xff]
      %v264 = vld [vmem:[%s3 + $0x10] sm:$0xff]
      %v265 = vld [vmem:[%s3 + $0x18] sm:$0xff]
      %v266 = vld [vmem:[%s3 + $0x20] sm:$0xff]
      %v267 = vld [vmem:[%s3 + $0x28] sm:$0xff]
      %v268 = vld [vmem:[%s3 + $0x30] sm:$0xff]
      %v269 = vld [vmem:[%s3 + $0x38] sm:$0xff]
      %v270 = vld [vmem:[%s4] sm:$0x1]
      %v272 = vlaneseq
      %v273 = vshrl.u32 %v272, 7
      %v274 = vsub.s32 0, %v273
      %v275 = vrot.slane %v261, %v274
      %vm277 = vcmask 31744
      %v279 = vsel %vm277, %v228, 0
      %v282 = vsel %vm277, %v229, 0
      %v285 = vsel %vm277, %v230, 0
      %v288 = vsel %vm277, %v231, 0
      %v291 = vsel %vm277, %v232, 0
      %v294 = vsel %vm277, %v233, 0
      %v297 = vsel %vm277, %v234, 0
      %v300 = vsel %vm277, %v235, 0
      %v303 = vsel %vm277, %v236, 0
      %v306 = vsel %vm277, %v237, 0
      %v309 = vsel %vm277, %v238, 0
      %v312 = vsel %vm277, %v239, 0
      %v315 = vsel %vm277, %v240, 0
      %v318 = vsel %vm277, %v241, 0
      %v321 = vsel %vm277, %v242, 0
      %v324 = vsel %vm277, %v243, 0
      %v327 = vsel %vm277, %v244, 0
      %v330 = vsel %vm277, %v245, 0
      %v333 = vsel %vm277, %v246, 0
      %v336 = vsel %vm277, %v247, 0
      %v339 = vsel %vm277, %v248, 0
      %v342 = vsel %vm277, %v249, 0
      %v345 = vsel %vm277, %v250, 0
      %v348 = vsel %vm277, %v251, 0
      %v351 = vsel %vm277, %v252, 0
      %v354 = vsel %vm277, %v253, 0
      %v357 = vsel %vm277, %v254, 0
      %v360 = vsel %vm277, %v255, 0
      %v363 = vsel %vm277, %v256, 0
      %v366 = vsel %vm277, %v257, 0
      %v369 = vsel %vm277, %v258, 0
      %v372 = vsel %vm277, %v259, 0
      %vm374 = vcmask 1043456
      %v376 = vsel %vm374, %v260, 0
      %378 = vmatprep.subr.mxu0 0.0
      %379 = vmatpush1.msra.mxu0 %v376
      %380 = vmatprep.subr.mxu0 0.0
      %381 = vmatpush1.msra.mxu0 0.0
      %382 = vmatprep.subr.mxu0 0.0
      %383 = vmatpush1.msra.mxu0 0.0
      %384 = vmatprep.subr.mxu0 0.0
      %385 = vmatpush1.msra.mxu0 0.0
      %386 = vmatprep.subr.mxu0 0.0
      %387 = vmatpush1.msra.mxu0 0.0
      %388 = vmatprep.subr.mxu0 0.0
      %389 = vmatpush1.msra.mxu0 0.0
      %390 = vmatprep.subr.mxu0 0.0
      %391 = vmatpush1.msra.mxu0 0.0
      %392 = vmatprep.subr.mxu0 0.0
      %393 = vmatpush1.msra.mxu0 0.0
      %394 = vmatprep.subr.mxu0 0.0
      %395 = vmatpush1.msra.mxu0 0.0
      %396 = vmatprep.subr.mxu0 0.0
      %397 = vmatpush1.msra.mxu0 0.0
      %398 = vmatprep.subr.mxu0 0.0
      %399 = vmatpush1.msra.mxu0 0.0
      %400 = vmatprep.subr.mxu0 0.0
      %401 = vmatpush1.msra.mxu0 0.0
      %402 = vmatprep.subr.mxu0 0.0
      %403 = vmatpush1.msra.mxu0 0.0
      %404 = vmatprep.subr.mxu0 0.0
      %405 = vmatpush1.msra.mxu0 0.0
      %406 = vmatprep.subr.mxu0 0.0
      %407 = vmatpush1.msra.mxu0 0.0
      %408 = vmatprep.subr.mxu0 0.0
      %409 = vmatpush1.msra.mxu0 0.0
      %410 = vmatprep.subr.mxu0 0.0
      %411 = vmatpush1.msra.mxu0 0.0
      %412 = vmatprep.subr.mxu0 0.0
      %413 = vmatpush1.msra.mxu0 0.0
      %414 = vmatprep.subr.mxu0 0.0
      %415 = vmatpush1.msra.mxu0 0.0
      %416 = vmatprep.subr.mxu0 0.0
      %417 = vmatpush1.msra.mxu0 0.0
      %418 = vmatprep.subr.mxu0 0.0
      %419 = vmatpush1.msra.mxu0 0.0
      %420 = vmatprep.subr.mxu0 0.0
      %421 = vmatpush1.msra.mxu0 0.0
      %422 = vmatprep.subr.mxu0 0.0
      %423 = vmatpush1.msra.mxu0 0.0
      %424 = vmatprep.subr.mxu0 0.0
      %425 = vmatpush1.msra.mxu0 0.0
      %426 = vmatprep.subr.mxu0 0.0
      %427 = vmatpush1.msra.mxu0 0.0
      %428 = vmatprep.subr.mxu0 0.0
      %429 = vmatpush1.msra.mxu0 0.0
      %430 = vmatprep.subr.mxu0 0.0
      %431 = vmatpush1.msra.mxu0 0.0
      %432 = vmatprep.subr.mxu0 0.0
      %433 = vmatpush1.msra.mxu0 0.0
      %434 = vmatprep.subr.mxu0 0.0
      %435 = vmatpush1.msra.mxu0 0.0
      %436 = vmatprep.subr.mxu0 0.0
      %437 = vmatpush1.msra.mxu0 0.0
      %438 = vmatprep.subr.mxu0 0.0
      %439 = vmatpush1.msra.mxu0 0.0
      %440 = vmatprep.subr.mxu0 0.0
      %441 = vmatpush1.msra.mxu0 0.0
      %442 = vmatprep.mubr.f32.mxu0 0.0
      %443 = vmatmul.mubr.f32.gmra.mrb[0].mxu0 %v279
      %v444 = vpop.f32.mrb[0].mxu0
      %v445 = vadd.f32 %v275, %v444
      %v446 = vpop.f32.mrb[0].mxu0
      %447 = vmatprep.mubr.f32.mxu0 0.0
      %448 = vmatmul.mubr.f32.gmra.mrb[0].mxu0 %v282
      %v449 = vpop.f32.mrb[0].mxu0
      %v450 = vadd.f32 %v275, %v449
      %v451 = vpop.f32.mrb[0].mxu0
      %452 = vmatprep.mubr.f32.mxu0 0.0
      %453 = vmatmul.mubr.f32.gmra.mrb[0].mxu0 %v285
      %v454 = vpop.f32.mrb[0].mxu0
      %v455 = vadd.f32 %v275, %v454
      %v456 = vpop.f32.mrb[0].mxu0
      %457 = vmatprep.mubr.f32.mxu0 0.0
      %458 = vmatmul.mubr.f32.gmra.mrb[0].mxu0 %v288
      %v459 = vpop.f32.mrb[0].mxu0
      %v460 = vadd.f32 %v275, %v459
      %v461 = vpop.f32.mrb[0].mxu0
      %462 = vmatprep.mubr.f32.mxu0 0.0
      %463 = vmatmul.mubr.f32.gmra.mrb[0].mxu0 %v291
      %v464 = vpop.f32.mrb[0].mxu0
      %v465 = vadd.f32 %v275, %v464
      %v466 = vpop.f32.mrb[0].mxu0
      %467 = vmatprep.mubr.f32.mxu0 0.0
      %468 = vmatmul.mubr.f32.gmra.mrb[0].mxu0 %v294
      %v469 = vpop.f32.mrb[0].mxu0
      %v470 = vadd.f32 %v275, %v469
      %v471 = vpop.f32.mrb[0].mxu0
      %472 = vmatprep.mubr.f32.mxu0 0.0
      %473 = vmatmul.mubr.f32.gmra.mrb[0].mxu0 %v297
      %v474 = vpop.f32.mrb[0].mxu0
      %v475 = vadd.f32 %v275, %v474
      %v476 = vpop.f32.mrb[0].mxu0
      %477 = vmatprep.mubr.f32.mxu0 0.0
      %478 = vmatmul.mubr.f32.gmra.mrb[0].mxu0 %v300
      %v479 = vpop.f32.mrb[0].mxu0
      %v480 = vadd.f32 %v275, %v479
      %v481 = vpop.f32.mrb[0].mxu0
      %482 = vmatprep.mubr.f32.mxu0 0.0
      %483 = vmatmul.mubr.f32.gmra.mrb[0].mxu0 %v303
      %v484 = vpop.f32.mrb[0].mxu0
      %v485 = vadd.f32 %v275, %v484
      %v486 = vpop.f32.mrb[0].mxu0
      %487 = vmatprep.mubr.f32.mxu0 0.0
      %488 = vmatmul.mubr.f32.gmra.mrb[0].mxu0 %v306
      %v489 = vpop.f32.mrb[0].mxu0
      %v490 = vadd.f32 %v275, %v489
      %v491 = vpop.f32.mrb[0].mxu0
      %492 = vmatprep.mubr.f32.mxu0 0.0
      %493 = vmatmul.mubr.f32.gmra.mrb[0].mxu0 %v309
      %v494 = vpop.f32.mrb[0].mxu0
      %v495 = vadd.f32 %v275, %v494
      %v496 = vpop.f32.mrb[0].mxu0
      %497 = vmatprep.mubr.f32.mxu0 0.0
      %498 = vmatmul.mubr.f32.gmra.mrb[0].mxu0 %v312
      %v499 = vpop.f32.mrb[0].mxu0
      %v500 = vadd.f32 %v275, %v499
      %v501 = vpop.f32.mrb[0].mxu0
      %502 = vmatprep.mubr.f32.mxu0 0.0
      %503 = vmatmul.mubr.f32.gmra.mrb[0].mxu0 %v315
      %v504 = vpop.f32.mrb[0].mxu0
      %v505 = vadd.f32 %v275, %v504
      %v506 = vpop.f32.mrb[0].mxu0
      %507 = vmatprep.mubr.f32.mxu0 0.0
      %508 = vmatmul.mubr.f32.gmra.mrb[0].mxu0 %v318
      %v509 = vpop.f32.mrb[0].mxu0
      %v510 = vadd.f32 %v275, %v509
      %v511 = vpop.f32.mrb[0].mxu0
      %512 = vmatprep.mubr.f32.mxu0 0.0
      %513 = vmatmul.mubr.f32.gmra.mrb[0].mxu0 %v321
      %v514 = vpop.f32.mrb[0].mxu0
      %v515 = vadd.f32 %v275, %v514
      %v516 = vpop.f32.mrb[0].mxu0
      %517 = vmatprep.mubr.f32.mxu0 0.0
      %518 = vmatmul.mubr.f32.gmra.mrb[0].mxu0 %v324
      %v519 = vpop.f32.mrb[0].mxu0
      %v520 = vadd.f32 %v275, %v519
      %v521 = vpop.f32.mrb[0].mxu0
      %522 = vmatprep.mubr.f32.mxu0 0.0
      %523 = vmatmul.mubr.f32.gmra.mrb[0].mxu0 %v327
      %v524 = vpop.f32.mrb[0].mxu0
      %v525 = vadd.f32 %v275, %v524
      %v526 = vpop.f32.mrb[0].mxu0
      %527 = vmatprep.mubr.f32.mxu0 0.0
      %528 = vmatmul.mubr.f32.gmra.mrb[0].mxu0 %v330
      %v529 = vpop.f32.mrb[0].mxu0
      %v530 = vadd.f32 %v275, %v529
      %v531 = vpop.f32.mrb[0].mxu0
      %532 = vmatprep.mubr.f32.mxu0 0.0
      %533 = vmatmul.mubr.f32.gmra.mrb[0].mxu0 %v333
      %v534 = vpop.f32.mrb[0].mxu0
      %v535 = vadd.f32 %v275, %v534
      %v536 = vpop.f32.mrb[0].mxu0
      %537 = vmatprep.mubr.f32.mxu0 0.0
      %538 = vmatmul.mubr.f32.gmra.mrb[0].mxu0 %v336
      %v539 = vpop.f32.mrb[0].mxu0
      %v540 = vadd.f32 %v275, %v539
      %v541 = vpop.f32.mrb[0].mxu0
      %542 = vmatprep.mubr.f32.mxu0 0.0
      %543 = vmatmul.mubr.f32.gmra.mrb[0].mxu0 %v339
      %v544 = vpop.f32.mrb[0].mxu0
      %v545 = vadd.f32 %v275, %v544
      %v546 = vpop.f32.mrb[0].mxu0
      %547 = vmatprep.mubr.f32.mxu0 0.0
      %548 = vmatmul.mubr.f32.gmra.mrb[0].mxu0 %v342
      %v549 = vpop.f32.mrb[0].mxu0
      %v550 = vadd.f32 %v275, %v549
      %v551 = vpop.f32.mrb[0].mxu0
      %552 = vmatprep.mubr.f32.mxu0 0.0
      %553 = vmatmul.mubr.f32.gmra.mrb[0].mxu0 %v345
      %v554 = vpop.f32.mrb[0].mxu0
      %v555 = vadd.f32 %v275, %v554
      %v556 = vpop.f32.mrb[0].mxu0
      %557 = vmatprep.mubr.f32.mxu0 0.0
      %558 = vmatmul.mubr.f32.gmra.mrb[0].mxu0 %v348
      %v559 = vpop.f32.mrb[0].mxu0
      %v560 = vadd.f32 %v275, %v559
      %v561 = vpop.f32.mrb[0].mxu0
      %562 = vmatprep.mubr.f32.mxu0 0.0
      %563 = vmatmul.mubr.f32.gmra.mrb[0].mxu0 %v351
      %v564 = vpop.f32.mrb[0].mxu0
      %v565 = vadd.f32 %v275, %v564
      %v566 = vpop.f32.mrb[0].mxu0
      %567 = vmatprep.mubr.f32.mxu0 0.0
      %568 = vmatmul.mubr.f32.gmra.mrb[0].mxu0 %v354
      %v569 = vpop.f32.mrb[0].mxu0
      %v570 = vadd.f32 %v275, %v569
      %v571 = vpop.f32.mrb[0].mxu0
      %572 = vmatprep.mubr.f32.mxu0 0.0
      %573 = vmatmul.mubr.f32.gmra.mrb[0].mxu0 %v357
      %v574 = vpop.f32.mrb[0].mxu0
      %v575 = vadd.f32 %v275, %v574
      %v576 = vpop.f32.mrb[0].mxu0
      %577 = vmatprep.mubr.f32.mxu0 0.0
      %578 = vmatmul.mubr.f32.gmra.mrb[0].mxu0 %v360
      %v579 = vpop.f32.mrb[0].mxu0
      %v580 = vadd.f32 %v275, %v579
      %v581 = vpop.f32.mrb[0].mxu0
      %582 = vmatprep.mubr.f32.mxu0 0.0
      %583 = vmatmul.mubr.f32.gmra.mrb[0].mxu0 %v363
      %v584 = vpop.f32.mrb[0].mxu0
      %v585 = vadd.f32 %v275, %v584
      %v586 = vpop.f32.mrb[0].mxu0
      %587 = vmatprep.mubr.f32.mxu0 0.0
      %588 = vmatmul.mubr.f32.gmra.mrb[0].mxu0 %v366
      %v589 = vpop.f32.mrb[0].mxu0
      %v590 = vadd.f32 %v275, %v589
      %v591 = vpop.f32.mrb[0].mxu0
      %592 = vmatprep.mubr.f32.mxu0 0.0
      %593 = vmatmul.mubr.f32.gmra.mrb[0].mxu0 %v369
      %v594 = vpop.f32.mrb[0].mxu0
      %v595 = vadd.f32 %v275, %v594
      %v596 = vpop.f32.mrb[0].mxu0
      %597 = vmatprep.mubr.f32.mxu0 0.0
      %598 = vmatmul.mubr.f32.gmra.mrb[0].mxu0 %v372
      %v599 = vpop.f32.mrb[0].mxu0
      %v600 = vadd.f32 %v275, %v599
      %v601 = vpop.f32.mrb[0].mxu0
      %602 = vdwg.mxu0
      %v603 = vmax.f32 %v445, 0.0
      %v604 = vmax.f32 %v450, 0.0
      %v605 = vmax.f32 %v455, 0.0
      %v606 = vmax.f32 %v460, 0.0
      %v607 = vmax.f32 %v465, 0.0
      %v608 = vmax.f32 %v470, 0.0
      %v609 = vmax.f32 %v475, 0.0
      %v610 = vmax.f32 %v480, 0.0
      %v611 = vmax.f32 %v485, 0.0
      %v612 = vmax.f32 %v490, 0.0
      %v613 = vmax.f32 %v495, 0.0
      %v614 = vmax.f32 %v500, 0.0
      %v615 = vmax.f32 %v505, 0.0
      %v616 = vmax.f32 %v510, 0.0
      %v617 = vmax.f32 %v515, 0.0
      %v618 = vmax.f32 %v520, 0.0
      %v619 = vmax.f32 %v525, 0.0
      %v620 = vmax.f32 %v530, 0.0
      %v621 = vmax.f32 %v535, 0.0
      %v622 = vmax.f32 %v540, 0.0
      %v623 = vmax.f32 %v545, 0.0
      %v624 = vmax.f32 %v550, 0.0
      %v625 = vmax.f32 %v555, 0.0
      %v626 = vmax.f32 %v560, 0.0
      %v627 = vmax.f32 %v565, 0.0
      %v628 = vmax.f32 %v570, 0.0
      %v629 = vmax.f32 %v575, 0.0
      %v630 = vmax.f32 %v580, 0.0
      %v631 = vmax.f32 %v585, 0.0
      %v632 = vmax.f32 %v590, 0.0
      %v633 = vmax.f32 %v595, 0.0
      %v634 = vmax.f32 %v600, 0.0
      %v636 = vlaneseq
      %v637 = vshrl.u32 %v636, 7
      %v638 = vsub.s32 0, %v637
      %v639 = vrot.slane %v270, %v638
      %vm641 = vcmask 523264
      %v643 = vsel %vm641, %v603, 0
      %v646 = vsel %vm641, %v604, 0
      %v649 = vsel %vm641, %v605, 0
      %v652 = vsel %vm641, %v606, 0
      %v655 = vsel %vm641, %v607, 0
      %v658 = vsel %vm641, %v608, 0
      %v661 = vsel %vm641, %v609, 0
      %v664 = vsel %vm641, %v610, 0
      %v667 = vsel %vm641, %v611, 0
      %v670 = vsel %vm641, %v612, 0
      %v673 = vsel %vm641, %v613, 0
      %v676 = vsel %vm641, %v614, 0
      %v679 = vsel %vm641, %v615, 0
      %v682 = vsel %vm641, %v616, 0
      %v685 = vsel %vm641, %v617, 0
      %v688 = vsel %vm641, %v618, 0
      %v691 = vsel %vm641, %v619, 0
      %v694 = vsel %vm641, %v620, 0
      %v697 = vsel %vm641, %v621, 0
      %v700 = vsel %vm641, %v622, 0
      %v703 = vsel %vm641, %v623, 0
      %v706 = vsel %vm641, %v624, 0
      %v709 = vsel %vm641, %v625, 0
      %v712 = vsel %vm641, %v626, 0
      %v715 = vsel %vm641, %v627, 0
      %v718 = vsel %vm641, %v628, 0
      %v721 = vsel %vm641, %v629, 0
      %v724 = vsel %vm641, %v630, 0
      %v727 = vsel %vm641, %v631, 0
      %v730 = vsel %vm641, %v632, 0
      %v733 = vsel %vm641, %v633, 0
      %v736 = vsel %vm641, %v634, 0
      %738 = vmatprep.subr.mxu0 0.0
      %739 = vmatpush1.msra.mxu0 %v262
      %740 = vmatprep.subr.mxu0 0.0
      %741 = vmatpush1.msra.mxu0 %v263
      %742 = vmatprep.subr.mxu0 0.0
      %743 = vmatpush1.msra.mxu0 %v264
      %744 = vmatprep.subr.mxu0 0.0
      %745 = vmatpush1.msra.mxu0 %v265
      %746 = vmatprep.subr.mxu0 0.0
      %747 = vmatpush1.msra.mxu0 %v266
      %748 = vmatprep.subr.mxu0 0.0
      %749 = vmatpush1.msra.mxu0 %v267
      %750 = vmatprep.subr.mxu0 0.0
      %751 = vmatpush1.msra.mxu0 %v268
      %752 = vmatprep.subr.mxu0 0.0
      %753 = vmatpush1.msra.mxu0 %v269
      %754 = vmatprep.subr.mxu0 0.0
      %755 = vmatpush1.msra.mxu0 0.0
      %756 = vmatprep.subr.mxu0 0.0
      %757 = vmatpush1.msra.mxu0 0.0
      %758 = vmatprep.subr.mxu0 0.0
      %759 = vmatpush1.msra.mxu0 0.0
      %760 = vmatprep.subr.mxu0 0.0
      %761 = vmatpush1.msra.mxu0 0.0
      %762 = vmatprep.subr.mxu0 0.0
      %763 = vmatpush1.msra.mxu0 0.0
      %764 = vmatprep.subr.mxu0 0.0
      %765 = vmatpush1.msra.mxu0 0.0
      %766 = vmatprep.subr.mxu0 0.0
      %767 = vmatpush1.msra.mxu0 0.0
      %768 = vmatprep.subr.mxu0 0.0
      %769 = vmatpush1.msra.mxu0 0.0
      %770 = vmatprep.subr.mxu0 0.0
      %771 = vmatpush1.msra.mxu0 0.0
      %772 = vmatprep.subr.mxu0 0.0
      %773 = vmatpush1.msra.mxu0 0.0
      %774 = vmatprep.subr.mxu0 0.0
      %775 = vmatpush1.msra.mxu0 0.0
      %776 = vmatprep.subr.mxu0 0.0
      %777 = vmatpush1.msra.mxu0 0.0
      %778 = vmatprep.subr.mxu0 0.0
      %779 = vmatpush1.msra.mxu0 0.0
      %780 = vmatprep.subr.mxu0 0.0
      %781 = vmatpush1.msra.mxu0 0.0
      %782 = vmatprep.subr.mxu0 0.0
      %783 = vmatpush1.msra.mxu0 0.0
      %784 = vmatprep.subr.mxu0 0.0
      %785 = vmatpush1.msra.mxu0 0.0
      %786 = vmatprep.subr.mxu0 0.0
      %787 = vmatpush1.msra.mxu0 0.0
      %788 = vmatprep.subr.mxu0 0.0
      %789 = vmatpush1.msra.mxu0 0.0
      %790 = vmatprep.subr.mxu0 0.0
      %791 = vmatpush1.msra.mxu0 0.0
      %792 = vmatprep.subr.mxu0 0.0
      %793 = vmatpush1.msra.mxu0 0.0
      %794 = vmatprep.subr.mxu0 0.0
      %795 = vmatpush1.msra.mxu0 0.0
      %796 = vmatprep.subr.mxu0 0.0
      %797 = vmatpush1.msra.mxu0 0.0
      %798 = vmatprep.subr.mxu0 0.0
      %799 = vmatpush1.msra.mxu0 0.0
      %800 = vmatprep.subr.mxu0 0.0
      %801 = vmatpush1.msra.mxu0 0.0
      %802 = vmatprep.mubr.f32.mxu0 0.0
      %803 = vmatmul.mubr.f32.gmra.mrb[0].mxu0 %v643
      %v804 = vpop.f32.mrb[0].mxu0
      %v805 = vadd.f32 %v639, %v804
      %v806 = vpop.f32.mrb[0].mxu0
      %807 = vmatprep.mubr.f32.mxu0 0.0
      %808 = vmatmul.mubr.f32.gmra.mrb[0].mxu0 %v646
      %v809 = vpop.f32.mrb[0].mxu0
      %v810 = vadd.f32 %v639, %v809
      %v811 = vpop.f32.mrb[0].mxu0
      %812 = vmatprep.mubr.f32.mxu0 0.0
      %813 = vmatmul.mubr.f32.gmra.mrb[0].mxu0 %v649
      %v814 = vpop.f32.mrb[0].mxu0
      %v815 = vadd.f32 %v639, %v814
      %v816 = vpop.f32.mrb[0].mxu0
      %817 = vmatprep.mubr.f32.mxu0 0.0
      %818 = vmatmul.mubr.f32.gmra.mrb[0].mxu0 %v652
      %v819 = vpop.f32.mrb[0].mxu0
      %v820 = vadd.f32 %v639, %v819
      %v821 = vpop.f32.mrb[0].mxu0
      %822 = vmatprep.mubr.f32.mxu0 0.0
      %823 = vmatmul.mubr.f32.gmra.mrb[0].mxu0 %v655
      %v824 = vpop.f32.mrb[0].mxu0
      %v825 = vadd.f32 %v639, %v824
      %v826 = vpop.f32.mrb[0].mxu0
      %827 = vmatprep.mubr.f32.mxu0 0.0
      %828 = vmatmul.mubr.f32.gmra.mrb[0].mxu0 %v658
      %v829 = vpop.f32.mrb[0].mxu0
      %v830 = vadd.f32 %v639, %v829
      %v831 = vpop.f32.mrb[0].mxu0
      %832 = vmatprep.mubr.f32.mxu0 0.0
      %833 = vmatmul.mubr.f32.gmra.mrb[0].mxu0 %v661
      %v834 = vpop.f32.mrb[0].mxu0
      %v835 = vadd.f32 %v639, %v834
      %v836 = vpop.f32.mrb[0].mxu0
      %837 = vmatprep.mubr.f32.mxu0 0.0
      %838 = vmatmul.mubr.f32.gmra.mrb[0].mxu0 %v664
      %v839 = vpop.f32.mrb[0].mxu0
      %v840 = vadd.f32 %v639, %v839
      %v841 = vpop.f32.mrb[0].mxu0
      %842 = vmatprep.mubr.f32.mxu0 0.0
      %843 = vmatmul.mubr.f32.gmra.mrb[0].mxu0 %v667
      %v844 = vpop.f32.mrb[0].mxu0
      %v845 = vadd.f32 %v639, %v844
      %v846 = vpop.f32.mrb[0].mxu0
      %847 = vmatprep.mubr.f32.mxu0 0.0
      %848 = vmatmul.mubr.f32.gmra.mrb[0].mxu0 %v670
      %v849 = vpop.f32.mrb[0].mxu0
      %v850 = vadd.f32 %v639, %v849
      %v851 = vpop.f32.mrb[0].mxu0
      %852 = vmatprep.mubr.f32.mxu0 0.0
      %853 = vmatmul.mubr.f32.gmra.mrb[0].mxu0 %v673
      %v854 = vpop.f32.mrb[0].mxu0
      %v855 = vadd.f32 %v639, %v854
      %v856 = vpop.f32.mrb[0].mxu0
      %857 = vmatprep.mubr.f32.mxu0 0.0
      %858 = vmatmul.mubr.f32.gmra.mrb[0].mxu0 %v676
      %v859 = vpop.f32.mrb[0].mxu0
      %v860 = vadd.f32 %v639, %v859
      %v861 = vpop.f32.mrb[0].mxu0
      %862 = vmatprep.mubr.f32.mxu0 0.0
      %863 = vmatmul.mubr.f32.gmra.mrb[0].mxu0 %v679
      %v864 = vpop.f32.mrb[0].mxu0
      %v865 = vadd.f32 %v639, %v864
      %v866 = vpop.f32.mrb[0].mxu0
      %867 = vmatprep.mubr.f32.mxu0 0.0
      %868 = vmatmul.mubr.f32.gmra.mrb[0].mxu0 %v682
      %v869 = vpop.f32.mrb[0].mxu0
      %v870 = vadd.f32 %v639, %v869
      %v871 = vpop.f32.mrb[0].mxu0
      %872 = vmatprep.mubr.f32.mxu0 0.0
      %873 = vmatmul.mubr.f32.gmra.mrb[0].mxu0 %v685
      %v874 = vpop.f32.mrb[0].mxu0
      %v875 = vadd.f32 %v639, %v874
      %v876 = vpop.f32.mrb[0].mxu0
      %877 = vmatprep.mubr.f32.mxu0 0.0
      %878 = vmatmul.mubr.f32.gmra.mrb[0].mxu0 %v688
      %v879 = vpop.f32.mrb[0].mxu0
      %v880 = vadd.f32 %v639, %v879
      %v881 = vpop.f32.mrb[0].mxu0
      %882 = vmatprep.mubr.f32.mxu0 0.0
      %883 = vmatmul.mubr.f32.gmra.mrb[0].mxu0 %v691
      %v884 = vpop.f32.mrb[0].mxu0
      %v885 = vadd.f32 %v639, %v884
      %v886 = vpop.f32.mrb[0].mxu0
      %887 = vmatprep.mubr.f32.mxu0 0.0
      %888 = vmatmul.mubr.f32.gmra.mrb[0].mxu0 %v694
      %v889 = vpop.f32.mrb[0].mxu0
      %v890 = vadd.f32 %v639, %v889
      %v891 = vpop.f32.mrb[0].mxu0
      %892 = vmatprep.mubr.f32.mxu0 0.0
      %893 = vmatmul.mubr.f32.gmra.mrb[0].mxu0 %v697
      %v894 = vpop.f32.mrb[0].mxu0
      %v895 = vadd.f32 %v639, %v894
      %v896 = vpop.f32.mrb[0].mxu0
      %897 = vmatprep.mubr.f32.mxu0 0.0
      %898 = vmatmul.mubr.f32.gmra.mrb[0].mxu0 %v700
      %v899 = vpop.f32.mrb[0].mxu0
      %v900 = vadd.f32 %v639, %v899
      %v901 = vpop.f32.mrb[0].mxu0
      %902 = vmatprep.mubr.f32.mxu0 0.0
      %903 = vmatmul.mubr.f32.gmra.mrb[0].mxu0 %v703
      %v904 = vpop.f32.mrb[0].mxu0
      %v905 = vadd.f32 %v639, %v904
      %v906 = vpop.f32.mrb[0].mxu0
      %907 = vmatprep.mubr.f32.mxu0 0.0
      %908 = vmatmul.mubr.f32.gmra.mrb[0].mxu0 %v706
      %v909 = vpop.f32.mrb[0].mxu0
      %v910 = vadd.f32 %v639, %v909
      %v911 = vpop.f32.mrb[0].mxu0
      %912 = vmatprep.mubr.f32.mxu0 0.0
      %913 = vmatmul.mubr.f32.gmra.mrb[0].mxu0 %v709
      %v914 = vpop.f32.mrb[0].mxu0
      %v915 = vadd.f32 %v639, %v914
      %v916 = vpop.f32.mrb[0].mxu0
      %917 = vmatprep.mubr.f32.mxu0 0.0
      %918 = vmatmul.mubr.f32.gmra.mrb[0].mxu0 %v712
      %v919 = vpop.f32.mrb[0].mxu0
      %v920 = vadd.f32 %v639, %v919
      %v921 = vpop.f32.mrb[0].mxu0
      %922 = vmatprep.mubr.f32.mxu0 0.0
      %923 = vmatmul.mubr.f32.gmra.mrb[0].mxu0 %v715
      %v924 = vpop.f32.mrb[0].mxu0
      %v925 = vadd.f32 %v639, %v924
      %v926 = vpop.f32.mrb[0].mxu0
      %927 = vmatprep.mubr.f32.mxu0 0.0
      %928 = vmatmul.mubr.f32.gmra.mrb[0].mxu0 %v718
      %v929 = vpop.f32.mrb[0].mxu0
      %v930 = vadd.f32 %v639, %v929
      %v931 = vpop.f32.mrb[0].mxu0
      %932 = vmatprep.mubr.f32.mxu0 0.0
      %933 = vmatmul.mubr.f32.gmra.mrb[0].mxu0 %v721
      %v934 = vpop.f32.mrb[0].mxu0
      %v935 = vadd.f32 %v639, %v934
      %v936 = vpop.f32.mrb[0].mxu0
      %937 = vmatprep.mubr.f32.mxu0 0.0
      %938 = vmatmul.mubr.f32.gmra.mrb[0].mxu0 %v724
      %v939 = vpop.f32.mrb[0].mxu0
      %v940 = vadd.f32 %v639, %v939
      %v941 = vpop.f32.mrb[0].mxu0
      %942 = vmatprep.mubr.f32.mxu0 0.0
      %943 = vmatmul.mubr.f32.gmra.mrb[0].mxu0 %v727
      %v944 = vpop.f32.mrb[0].mxu0
      %v945 = vadd.f32 %v639, %v944
      %v946 = vpop.f32.mrb[0].mxu0
      %947 = vmatprep.mubr.f32.mxu0 0.0
      %948 = vmatmul.mubr.f32.gmra.mrb[0].mxu0 %v730
      %v949 = vpop.f32.mrb[0].mxu0
      %v950 = vadd.f32 %v639, %v949
      %v951 = vpop.f32.mrb[0].mxu0
      %952 = vmatprep.mubr.f32.mxu0 0.0
      %953 = vmatmul.mubr.f32.gmra.mrb[0].mxu0 %v733
      %v954 = vpop.f32.mrb[0].mxu0
      %v955 = vadd.f32 %v639, %v954
      %v956 = vpop.f32.mrb[0].mxu0
      %957 = vmatprep.mubr.f32.mxu0 0.0
      %958 = vmatmul.mubr.f32.gmra.mrb[0].mxu0 %v736
      %v959 = vpop.f32.mrb[0].mxu0
      %v960 = vadd.f32 %v639, %v959
      %v961 = vpop.f32.mrb[0].mxu0
      %962 = vdwg.mxu0
      %vm963 = vcmask 15360
      %964 = vst.msk [vmem:[%s226] sm:$0xff] %vm963, %v805
      %965 = vst.msk [vmem:[%s226 + $0x8] sm:$0xff] %vm963, %v810
      %966 = vst.msk [vmem:[%s226 + $0x10] sm:$0xff] %vm963, %v815
      %967 = vst.msk [vmem:[%s226 + $0x18] sm:$0xff] %vm963, %v820
      %968 = vst.msk [vmem:[%s226 + $0x20] sm:$0xff] %vm963, %v825
      %969 = vst.msk [vmem:[%s226 + $0x28] sm:$0xff] %vm963, %v830
      %970 = vst.msk [vmem:[%s226 + $0x30] sm:$0xff] %vm963, %v835
      %971 = vst.msk [vmem:[%s226 + $0x38] sm:$0xff] %vm963, %v840
      %972 = vst.msk [vmem:[%s226 + $0x40] sm:$0xff] %vm963, %v845
      %973 = vst.msk [vmem:[%s226 + $0x48] sm:$0xff] %vm963, %v850
      %974 = vst.msk [vmem:[%s226 + $0x50] sm:$0xff] %vm963, %v855
      %975 = vst.msk [vmem:[%s226 + $0x58] sm:$0xff] %vm963, %v860
      %976 = vst.msk [vmem:[%s226 + $0x60] sm:$0xff] %vm963, %v865
      %977 = vst.msk [vmem:[%s226 + $0x68] sm:$0xff] %vm963, %v870
      %978 = vst.msk [vmem:[%s226 + $0x70] sm:$0xff] %vm963, %v875
      %979 = vst.msk [vmem:[%s226 + $0x78] sm:$0xff] %vm963, %v880
      %980 = vst.msk [vmem:[%s226 + $0x80] sm:$0xff] %vm963, %v885
      %981 = vst.msk [vmem:[%s226 + $0x88] sm:$0xff] %vm963, %v890
      %982 = vst.msk [vmem:[%s226 + $0x90] sm:$0xff] %vm963, %v895
      %983 = vst.msk [vmem:[%s226 + $0x98] sm:$0xff] %vm963, %v900
      %984 = vst.msk [vmem:[%s226 + $0xa0] sm:$0xff] %vm963, %v905
      %985 = vst.msk [vmem:[%s226 + $0xa8] sm:$0xff] %vm963, %v910
      %986 = vst.msk [vmem:[%s226 + $0xb0] sm:$0xff] %vm963, %v915
      %987 = vst.msk [vmem:[%s226 + $0xb8] sm:$0xff] %vm963, %v920
      %988 = vst.msk [vmem:[%s226 + $0xc0] sm:$0xff] %vm963, %v925
      %989 = vst.msk [vmem:[%s226 + $0xc8] sm:$0xff] %vm963, %v930
      %990 = vst.msk [vmem:[%s226 + $0xd0] sm:$0xff] %vm963, %v935
      %991 = vst.msk [vmem:[%s226 + $0xd8] sm:$0xff] %vm963, %v940
      %992 = vst.msk [vmem:[%s226 + $0xe0] sm:$0xff] %vm963, %v945
      %993 = vst.msk [vmem:[%s226 + $0xe8] sm:$0xff] %vm963, %v950
      %994 = vst.msk [vmem:[%s226 + $0xf0] sm:$0xff] %vm963, %v955
      %995 = vst.msk [vmem:[%s226 + $0xf8] sm:$0xff] %vm963, %v960
      %s996 = smul.u32 32, %s16
      %p997 = scmp.lt.s32.totalorder %s996, 127
      %s998 = scalar_select %p997, %s996, 127
      %s999 = smul.addr %s998, 8
      %s1000 = scalar_lea.vmem %s5, %s999
      // Predicated region
      $region41: #{deep_cross_entropy_forward.1} parent=39 // pred_check
        %p1001 = pneg %p144
      $region42: #{deep_cross_entropy_forward.1} parent=39 // pred_check_branch
        %1003 = sbr.rel (%p1001) target = $region44
      $region43: #{deep_cross_entropy_forward.1} parent=39 // pred_region
        %s1004 = smul.u32 32, %s16
      $region44: #{deep_cross_entropy_forward.1} parent=39 // pred_fallthru
        _
    $region40: #{deep_cross_entropy_forward.1} parent=5 // pred_fallthru
      _
    %p1005 = scmp.le.s32.totalorder 2, %s11
    // Predicated region
    $region45: #{deep_cross_entropy_forward.1} parent=5 // pred_check
      %p1006 = pneg %p1005
    $region46: #{deep_cross_entropy_forward.1} parent=5 // pred_check_branch
      %1008 = sbr.rel (%p1006) target = $region48
    $region47: #{deep_cross_entropy_forward.1} parent=5 // pred_region
      %s1009 = ssub.s32 %s11, 2
      // Predicated region
      $region49: #{deep_cross_entropy_forward.1} parent=47 // pred_check
        %p1010 = pneg %p150
      $region50: #{deep_cross_entropy_forward.1} parent=47 // pred_check_branch
        %1012 = sbr.rel (%p1010) target = $region52
      $region51: #{deep_cross_entropy_forward.1} parent=47 // pred_region
        %s1013 = smul.u32 32, %s17
        %p1014 = scmp.lt.s32.totalorder %s1013, 127
        %s1015 = scalar_select %p1014, %s1013, 127
        %s1016 = smul.addr %s1015, 8
        %s1017 = scalar_lea.vmem %s5, %s1016
      $region52: #{deep_cross_entropy_forward.1} parent=47 // pred_fallthru
        _
    $region48: #{deep_cross_entropy_forward.1} parent=5 // pred_fallthru
      _
  $region6: #{deep_cross_entropy_forward.1} parent=0 // loop_footer
    %s15 = sadd.s32 1, %s11
  $region7: #{deep_cross_entropy_forward.1} parent=0 // loop_footer_branch
    %10 = sbr.rel target = $region3
  $region8: #{deep_cross_entropy_forward.1} parent=0 // loop_exit
    _

</llo_original>
